<compile_context>
chip_gen: v5e
topology: v5e:2x2
jax: 0.10.0
libtpu: 0.0.40
codegen_flags: <defaults>
</compile_context>

<pallas_src>
import functools

import jax
import jax.numpy as jnp
from jax.experimental import pallas as pl
from jax.experimental.pallas import tpu as pltpu


def _mha_kernel(split_dim, block_h,
                q_ref, kT_ref, v_ref,
                wq_ref, bq_ref, wk_ref, bk_ref, wv_ref, bv_ref, wo_ref, bo_ref,
                out_ref, attn_ref):
    hb = pl.program_id(1)
    S, M = out_ref.shape[1], out_ref.shape[2]

    # First head block of this batch element: initialize the resident output
    # accumulator with the output-projection bias.
    @pl.when(hb == 0)
    def _init():
        out_ref[0] = jnp.broadcast_to(bo_ref[...], (S, M)).astype(out_ref.dtype)

    xq = q_ref[0]        # (S, M)   bf16
    xkT = kT_ref[0]      # (M, S)   bf16 (K pre-transposed in wrapper)
    xv = v_ref[0]        # (S, M)   bf16

    # Projections for this block of heads.  Full-M contraction keeps the MXU deep.
    # The 1/sqrt(D) scale is already folded into wq / bq by the wrapper, and the K
    # projection is produced already transposed -> no in-kernel transposes.
    qp = jnp.dot(xq, wq_ref[0], preferred_element_type=jnp.float32) + bq_ref[0]    # (S, Db)
    kpT = jnp.dot(wk_ref[0], xkT, preferred_element_type=jnp.float32) + bk_ref[0]  # (Db, S)
    vp = jnp.dot(xv, wv_ref[0], preferred_element_type=jnp.float32) + bv_ref[0]    # (S, Db)

    qp = qp.astype(jnp.bfloat16)
    kpT = kpT.astype(jnp.bfloat16)
    vp = vp.astype(jnp.bfloat16)
    wo = wo_ref[0]       # (Db, M)  bf16  (rows of Wo^T for this head block)

    acc = jnp.zeros((S, M), jnp.float32)
    for j in range(block_h):                     # static -> unrolled
        lo = j * split_dim
        qh = qp[:, lo:lo + split_dim]            # (S, D)
        khT = kpT[lo:lo + split_dim, :]          # (D, S)  already transposed
        vh = vp[:, lo:lo + split_dim]            # (S, D)

        s = jnp.dot(qh, khT, preferred_element_type=jnp.float32)      # (S, S)

        # Numerically-stable softmax (f32), EUP reciprocal for the normalization.
        m = jnp.max(s, axis=-1, keepdims=True)
        e = jnp.exp(s - m)
        denom = jnp.sum(e, axis=-1, keepdims=True)
        probs = e * pl.reciprocal(denom, approx=True)                  # (S, S) f32

        attn_ref[0, j] = probs

        ctx = jnp.dot(probs.astype(jnp.bfloat16), vh,
                      preferred_element_type=jnp.float32)              # (S, D)
        acc = acc + jnp.dot(ctx.astype(jnp.bfloat16), wo[lo:lo + split_dim, :],
                            preferred_element_type=jnp.float32)        # (S, M)

    out_ref[0] = out_ref[0] + acc


def multihead_attention(Q, K, V, params, *, num_heads, block_h=1):
    B, S, M = Q.shape
    assert M % num_heads == 0, "model_dim must be divisible by num_heads"
    assert num_heads % block_h == 0, "num_heads must be divisible by block_h"
    D = M // num_heads
    Db = block_h * D
    HB = num_heads // block_h
    scale = 1.0 / (float(D) ** 0.5)

    wq, bq, wk, bk, wv, bv, wo, bo = params
    cd = jnp.bfloat16  # MXU input dtype (f32 accumulation inside the kernel)

    # One-time wrapper-side weight prep (plain XLA ops, outside the kernel):
    #   * nn.Linear does x @ W.T, so Q/V weights are pre-transposed.
    #   * 1/sqrt(D) folded into Wq / bq.
    #   * weights pre-blocked along the head-block axis so BlockSpec index_maps slice
    #     them (no dynamic lane slicing in the kernel).
    wqT_b = ((wq.T * scale).reshape(M, HB, Db).transpose(1, 0, 2)).astype(cd)   # (HB, M, Db)
    wvT_b = (wv.T.reshape(M, HB, Db).transpose(1, 0, 2)).astype(cd)             # (HB, M, Db)
    wk_b = wk.reshape(HB, Db, M).astype(cd)                                      # (HB, Db, M)
    woT_b = wo.T.reshape(HB, Db, M).astype(cd)                                   # (HB, Db, M)
    bq_b = (bq * scale).reshape(HB, 1, Db).astype(jnp.float32)
    bv_b = bv.reshape(HB, 1, Db).astype(jnp.float32)
    bk_b = bk.reshape(HB, Db, 1).astype(jnp.float32)
    bo_2 = bo.reshape(1, M).astype(jnp.float32)

    Qc = Q.astype(cd)
    KTc = jnp.swapaxes(K, 1, 2).astype(cd)   # (B, M, S): K pre-transposed once
    Vc = V.astype(cd)

    kernel = functools.partial(_mha_kernel, D, block_h)

    # NOTE: weight blocks only vary with the head-block axis; on VMEM-tight chips
    # (v7x, 64 MiB) pipeline_mode=pl.Buffered(1) on the weight specs could drop their
    # second buffer, but they are already only 4*M*Db bf16 bytes per step here.
    out, attn = pl.pallas_call(
        kernel,
        out_shape=(
            jax.ShapeDtypeStruct((B, S, M), jnp.float32),
            jax.ShapeDtypeStruct((B, num_heads, S, S), jnp.float32),
        ),
        grid_spec=pltpu.PrefetchScalarGridSpec(
            num_scalar_prefetch=0,
            grid=(B, HB),
            in_specs=[
                pl.BlockSpec((1, S, M), lambda b, h: (b, 0, 0)),      # Q
                pl.BlockSpec((1, M, S), lambda b, h: (b, 0, 0)),      # K^T
                pl.BlockSpec((1, S, M), lambda b, h: (b, 0, 0)),      # V
                pl.BlockSpec((1, M, Db), lambda b, h: (h, 0, 0)),     # Wq^T (scaled)
                pl.BlockSpec((1, 1, Db), lambda b, h: (h, 0, 0)),     # bq (scaled)
                pl.BlockSpec((1, Db, M), lambda b, h: (h, 0, 0)),     # Wk (rows)
                pl.BlockSpec((1, Db, 1), lambda b, h: (h, 0, 0)),     # bk
                pl.BlockSpec((1, M, Db), lambda b, h: (h, 0, 0)),     # Wv^T
                pl.BlockSpec((1, 1, Db), lambda b, h: (h, 0, 0)),     # bv
                pl.BlockSpec((1, Db, M), lambda b, h: (h, 0, 0)),     # Wo^T (rows)
                pl.BlockSpec((1, M), lambda b, h: (0, 0)),            # bo
            ],
            out_specs=[
                pl.BlockSpec((1, S, M), lambda b, h: (b, 0, 0)),             # output (accum over h)
                pl.BlockSpec((1, block_h, S, S), lambda b, h: (b, h, 0, 0)),  # attn probs
            ],
        ),
        compiler_params=pltpu.CompilerParams(
            dimension_semantics=("parallel", "arbitrary")),
    )(Qc, KTc, Vc, wqT_b, bq_b, wk_b, bk_b, wvT_b, bv_b, woT_b, bo_2)
    return out, attn


def _reference(Q, K, V, params, *, num_heads):
    """Pure-JAX fp32 reference mirroring the PyTorch forward."""
    wq, bq, wk, bk, wv, bv, wo, bo = params
    B, S, M = Q.shape
    D = M // num_heads

    def split(x):
        return x.reshape(B, S, num_heads, D).transpose(0, 2, 1, 3)

    q = split(Q @ wq.T + bq)
    k = split(K @ wk.T + bk)
    v = split(V @ wv.T + bv)
    scores = jnp.einsum("bhqd,bhkd->bhqk", q, k) / jnp.sqrt(jnp.float32(D))
    probs = jax.nn.softmax(scores, axis=-1)
    ctx = jnp.einsum("bhqk,bhkd->bhqd", probs, v)
    ctx = ctx.transpose(0, 2, 1, 3).reshape(B, S, M)
    out = ctx @ wo.T + bo
    return out, probs


if __name__ == "__main__":
    B, S, M, H = 2, 8, 32, 4

    key = jax.random.PRNGKey(0)
    keys = jax.random.split(key, 11)

    Q = jax.random.normal(keys[0], (B, S, M), dtype=jnp.float32)
    K = jax.random.normal(keys[1], (B, S, M), dtype=jnp.float32)
    V = jax.random.normal(keys[2], (B, S, M), dtype=jnp.float32)

    def lin_init(kw, kb):
        w = jax.random.normal(kw, (M, M), dtype=jnp.float32) * 0.1
        b = jax.random.normal(kb, (M,), dtype=jnp.float32) * 0.1
        return w, b

    wq, bq = lin_init(keys[3], keys[4])
    wk, bk = lin_init(keys[5], keys[6])
    wv, bv = lin_init(keys[7], keys[8])
    wo, bo = lin_init(keys[9], keys[10])
    params = (wq, bq, wk, bk, wv, bv, wo, bo)

    # block_h=2 -> grid (B, 2): exercises the cross-head-block output accumulation.
    out, attn = multihead_attention(Q, K, V, params, num_heads=H, block_h=2)
    out = jax.block_until_ready(out)
    attn = jax.block_until_ready(attn)

    ref_out, ref_attn = _reference(Q, K, V, params, num_heads=H)
    assert out.shape == (B, S, M) and attn.shape == (B, H, S, S)
    # Tolerances loosened for bf16 MXU inputs (f32 accumulation) + approx reciprocal.
    assert jnp.allclose(out, ref_out, atol=3e-2, rtol=3e-2)
    assert jnp.allclose(attn, ref_attn, atol=2e-2, rtol=2e-2)

    print("KERNEL_OK")
</pallas_src>

<mosaic_0001>
module attributes {stable_mosaic.version = 11 : i64} {
  func.func @_mha_kernel(%arg0: i32, %arg1: i32, %arg2: memref<1x8x32xbf16, #tpu.memory_space<vmem>>, %arg3: memref<1x32x8xbf16, #tpu.memory_space<vmem>>, %arg4: memref<1x8x32xbf16, #tpu.memory_space<vmem>>, %arg5: memref<1x32x16xbf16, #tpu.memory_space<vmem>>, %arg6: memref<1x1x16xf32, #tpu.memory_space<vmem>>, %arg7: memref<1x16x32xbf16, #tpu.memory_space<vmem>>, %arg8: memref<1x16x1xf32, #tpu.memory_space<vmem>>, %arg9: memref<1x32x16xbf16, #tpu.memory_space<vmem>>, %arg10: memref<1x1x16xf32, #tpu.memory_space<vmem>>, %arg11: memref<1x16x32xbf16, #tpu.memory_space<vmem>>, %arg12: memref<1x32xf32, #tpu.memory_space<vmem>>, %arg13: memref<1x8x32xf32, #tpu.memory_space<vmem>>, %arg14: memref<1x2x8x8xf32, #tpu.memory_space<vmem>>) attributes {dimension_semantics = [#tpu.dimension_semantics<parallel>, #tpu.dimension_semantics<arbitrary>], iteration_bounds = array<i64: 2, 2>, scalar_prefetch = 0 : i64, scratch_operands = 0 : i64, tpu.core_type = #tpu.core_type<tc>, window_params = [{transform_indices = @transform_0, window_bounds = array<i64: 1, 8, 32>}, {transform_indices = @transform_1, window_bounds = array<i64: 1, 32, 8>}, {transform_indices = @transform_2, window_bounds = array<i64: 1, 8, 32>}, {transform_indices = @transform_3, window_bounds = array<i64: 1, 32, 16>}, {transform_indices = @transform_4, window_bounds = array<i64: 1, 1, 16>}, {transform_indices = @transform_5, window_bounds = array<i64: 1, 16, 32>}, {transform_indices = @transform_6, window_bounds = array<i64: 1, 16, 1>}, {transform_indices = @transform_7, window_bounds = array<i64: 1, 32, 16>}, {transform_indices = @transform_8, window_bounds = array<i64: 1, 1, 16>}, {transform_indices = @transform_9, window_bounds = array<i64: 1, 16, 32>}, {pipeline_mode = #tpu.pipeline_mode<synchronous>, transform_indices = @transform_10, window_bounds = array<i64: 1, 32>}, {transform_indices = @transform_11, window_bounds = array<i64: 1, 8, 32>}, {transform_indices = @transform_12, window_bounds = array<i64: 1, 2, 8, 8>}]} {
    %c0_i32 = arith.constant 0 : i32
    %0 = arith.cmpi eq, %arg1, %c0_i32 : i32
    %1 = arith.extui %0 : i1 to i32
    %c0_i32_0 = arith.constant 0 : i32
    %2 = arith.cmpi ne, %1, %c0_i32_0 : i32
    scf.if %2 {
      %c0_56 = arith.constant 0 : index
      %c0_57 = arith.constant 0 : index
      %88 = vector.load %arg12[%c0_56, %c0_57] : memref<1x32xf32, #tpu.memory_space<vmem>>, vector<1x32xf32>
      %89 = vector.shape_cast %88 : vector<1x32xf32> to vector<1x32xf32>
      %90 = vector.broadcast %89 : vector<1x32xf32> to vector<8x32xf32>
      %c0_58 = arith.constant 0 : index
      %c0_59 = arith.constant 0 : index
      %c0_60 = arith.constant 0 : index
      %91 = vector.load %arg13[%c0_58, %c0_59, %c0_60] : memref<1x8x32xf32, #tpu.memory_space<vmem>>, vector<1x8x32xf32>
      %92 = vector.shape_cast %91 : vector<1x8x32xf32> to vector<8x32xf32>
      %93 = vector.shape_cast %90 : vector<8x32xf32> to vector<1x8x32xf32>
      tpu.vector_store %arg13[%c0_58, %c0_59, %c0_60], %93 {strides = array<i32>} : memref<1x8x32xf32, #tpu.memory_space<vmem>>, vector<1x8x32xf32>,
    } else {
    }
    %c0 = arith.constant 0 : index
    %c0_1 = arith.constant 0 : index
    %c0_2 = arith.constant 0 : index
    %3 = vector.load %arg2[%c0, %c0_1, %c0_2] : memref<1x8x32xbf16, #tpu.memory_space<vmem>>, vector<1x8x32xbf16>
    %4 = vector.shape_cast %3 : vector<1x8x32xbf16> to vector<8x32xbf16>
    %c0_3 = arith.constant 0 : index
    %c0_4 = arith.constant 0 : index
    %c0_5 = arith.constant 0 : index
    %5 = vector.load %arg3[%c0_3, %c0_4, %c0_5] : memref<1x32x8xbf16, #tpu.memory_space<vmem>>, vector<1x32x8xbf16>
    %6 = vector.shape_cast %5 : vector<1x32x8xbf16> to vector<32x8xbf16>
    %c0_6 = arith.constant 0 : index
    %c0_7 = arith.constant 0 : index
    %c0_8 = arith.constant 0 : index
    %7 = vector.load %arg4[%c0_6, %c0_7, %c0_8] : memref<1x8x32xbf16, #tpu.memory_space<vmem>>, vector<1x8x32xbf16>
    %8 = vector.shape_cast %7 : vector<1x8x32xbf16> to vector<8x32xbf16>
    %c0_9 = arith.constant 0 : index
    %c0_10 = arith.constant 0 : index
    %c0_11 = arith.constant 0 : index
    %9 = vector.load %arg5[%c0_9, %c0_10, %c0_11] : memref<1x32x16xbf16, #tpu.memory_space<vmem>>, vector<1x32x16xbf16>
    %10 = vector.shape_cast %9 : vector<1x32x16xbf16> to vector<32x16xbf16>
    %cst = arith.constant dense<0.000000e+00> : vector<8x16xf32>
    %11 = tpu.matmul %4, %10, %cst {dimension_numbers = #tpu.dot_dimension_numbers<[1], [0], [0], [1], [0, 0, 1, 1], [], []>} : vector<8x32xbf16>, vector<32x16xbf16>, vector<8x16xf32> -> vector<8x16xf32>
    %c0_12 = arith.constant 0 : index
    %c0_13 = arith.constant 0 : index
    %c0_14 = arith.constant 0 : index
    %12 = vector.load %arg6[%c0_12, %c0_13, %c0_14] : memref<1x1x16xf32, #tpu.memory_space<vmem>>, vector<1x1x16xf32>
    %13 = vector.shape_cast %12 : vector<1x1x16xf32> to vector<1x16xf32>
    %14 = vector.broadcast %13 : vector<1x16xf32> to vector<8x16xf32>
    %15 = arith.addf %11, %14 : vector<8x16xf32>
    %c0_15 = arith.constant 0 : index
    %c0_16 = arith.constant 0 : index
    %c0_17 = arith.constant 0 : index
    %16 = vector.load %arg7[%c0_15, %c0_16, %c0_17] : memref<1x16x32xbf16, #tpu.memory_space<vmem>>, vector<1x16x32xbf16>
    %17 = vector.shape_cast %16 : vector<1x16x32xbf16> to vector<16x32xbf16>
    %cst_18 = arith.constant dense<0.000000e+00> : vector<16x8xf32>
    %18 = tpu.matmul %17, %6, %cst_18 {dimension_numbers = #tpu.dot_dimension_numbers<[1], [0], [0], [1], [0, 0, 1, 1], [], []>} : vector<16x32xbf16>, vector<32x8xbf16>, vector<16x8xf32> -> vector<16x8xf32>
    %c0_19 = arith.constant 0 : index
    %c0_20 = arith.constant 0 : index
    %c0_21 = arith.constant 0 : index
    %19 = vector.load %arg8[%c0_19, %c0_20, %c0_21] : memref<1x16x1xf32, #tpu.memory_space<vmem>>, vector<1x16x1xf32>
    %20 = vector.shape_cast %19 : vector<1x16x1xf32> to vector<16x1xf32>
    %21 = vector.broadcast %20 : vector<16x1xf32> to vector<16x8xf32>
    %22 = arith.addf %18, %21 : vector<16x8xf32>
    %c0_22 = arith.constant 0 : index
    %c0_23 = arith.constant 0 : index
    %c0_24 = arith.constant 0 : index
    %23 = vector.load %arg9[%c0_22, %c0_23, %c0_24] : memref<1x32x16xbf16, #tpu.memory_space<vmem>>, vector<1x32x16xbf16>
    %24 = vector.shape_cast %23 : vector<1x32x16xbf16> to vector<32x16xbf16>
    %cst_25 = arith.constant dense<0.000000e+00> : vector<8x16xf32>
    %25 = tpu.matmul %8, %24, %cst_25 {dimension_numbers = #tpu.dot_dimension_numbers<[1], [0], [0], [1], [0, 0, 1, 1], [], []>} : vector<8x32xbf16>, vector<32x16xbf16>, vector<8x16xf32> -> vector<8x16xf32>
    %c0_26 = arith.constant 0 : index
    %c0_27 = arith.constant 0 : index
    %c0_28 = arith.constant 0 : index
    %26 = vector.load %arg10[%c0_26, %c0_27, %c0_28] : memref<1x1x16xf32, #tpu.memory_space<vmem>>, vector<1x1x16xf32>
    %27 = vector.shape_cast %26 : vector<1x1x16xf32> to vector<1x16xf32>
    %28 = vector.broadcast %27 : vector<1x16xf32> to vector<8x16xf32>
    %29 = arith.addf %25, %28 : vector<8x16xf32>
    %30 = arith.truncf %15 : vector<8x16xf32> to vector<8x16xbf16>
    %31 = arith.truncf %22 : vector<16x8xf32> to vector<16x8xbf16>
    %32 = arith.truncf %29 : vector<8x16xf32> to vector<8x16xbf16>
    %c0_29 = arith.constant 0 : index
    %c0_30 = arith.constant 0 : index
    %c0_31 = arith.constant 0 : index
    %33 = vector.load %arg11[%c0_29, %c0_30, %c0_31] : memref<1x16x32xbf16, #tpu.memory_space<vmem>>, vector<1x16x32xbf16>
    %34 = vector.shape_cast %33 : vector<1x16x32xbf16> to vector<16x32xbf16>
    %cst_32 = arith.constant 0.000000e+00 : f32
    %35 = vector.broadcast %cst_32 : f32 to vector<8x32xf32>
    %36 = vector.extract_strided_slice %30 {offsets = [0, 0], sizes = [8, 8], strides = [1, 1]} : vector<8x16xbf16> to vector<8x8xbf16>
    %37 = vector.extract_strided_slice %31 {offsets = [0, 0], sizes = [8, 8], strides = [1, 1]} : vector<16x8xbf16> to vector<8x8xbf16>
    %38 = vector.extract_strided_slice %32 {offsets = [0, 0], sizes = [8, 8], strides = [1, 1]} : vector<8x16xbf16> to vector<8x8xbf16>
    %cst_33 = arith.constant dense<0.000000e+00> : vector<8x8xf32>
    %39 = tpu.matmul %36, %37, %cst_33 {dimension_numbers = #tpu.dot_dimension_numbers<[1], [0], [0], [1], [0, 0, 1, 1], [], []>} : vector<8x8xbf16>, vector<8x8xbf16>, vector<8x8xf32> -> vector<8x8xf32>
    %cst_34 = arith.constant dense<0xFF800000> : vector<8xf32>
    %40 = vector.multi_reduction <maximumf>, %39, %cst_34 [1] : vector<8x8xf32> to vector<8xf32>
    %41 = vector.shape_cast %40 : vector<8xf32> to vector<8x1xf32>
    %42 = vector.broadcast %41 : vector<8x1xf32> to vector<8x8xf32>
    %43 = arith.subf %39, %42 : vector<8x8xf32>
    %44 = math.exp %43 : vector<8x8xf32>
    %cst_35 = arith.constant dense<0.000000e+00> : vector<8xf32>
    %45 = vector.multi_reduction <add>, %44, %cst_35 [1] : vector<8x8xf32> to vector<8xf32>
    %46 = vector.shape_cast %45 : vector<8xf32> to vector<8x1xf32>
    %47 = tpu.reciprocal %46 {approx = true} : vector<8x1xf32> -> vector<8x1xf32>
    %48 = vector.broadcast %47 : vector<8x1xf32> to vector<8x8xf32>
    %49 = arith.mulf %44, %48 : vector<8x8xf32>
    %c0_36 = arith.constant 0 : index
    %c0_37 = arith.constant 0 : index
    %c0_38 = arith.constant 0 : index
    %c0_39 = arith.constant 0 : index
    %50 = vector.load %arg14[%c0_36, %c0_37, %c0_38, %c0_39] : memref<1x2x8x8xf32, #tpu.memory_space<vmem>>, vector<1x1x8x8xf32>
    %51 = vector.shape_cast %50 : vector<1x1x8x8xf32> to vector<8x8xf32>
    %52 = vector.shape_cast %49 : vector<8x8xf32> to vector<1x1x8x8xf32>
    tpu.vector_store %arg14[%c0_36, %c0_37, %c0_38, %c0_39], %52 {strides = array<i32>} : memref<1x2x8x8xf32, #tpu.memory_space<vmem>>, vector<1x1x8x8xf32>,
    %53 = arith.truncf %49 : vector<8x8xf32> to vector<8x8xbf16>
    %cst_40 = arith.constant dense<0.000000e+00> : vector<8x8xf32>
    %54 = tpu.matmul %53, %38, %cst_40 {dimension_numbers = #tpu.dot_dimension_numbers<[1], [0], [0], [1], [0, 0, 1, 1], [], []>} : vector<8x8xbf16>, vector<8x8xbf16>, vector<8x8xf32> -> vector<8x8xf32>
    %55 = arith.truncf %54 : vector<8x8xf32> to vector<8x8xbf16>
    %56 = vector.extract_strided_slice %34 {offsets = [0, 0], sizes = [8, 32], strides = [1, 1]} : vector<16x32xbf16> to vector<8x32xbf16>
    %cst_41 = arith.constant dense<0.000000e+00> : vector<8x32xf32>
    %57 = tpu.matmul %55, %56, %cst_41 {dimension_numbers = #tpu.dot_dimension_numbers<[1], [0], [0], [1], [0, 0, 1, 1], [], []>} : vector<8x8xbf16>, vector<8x32xbf16>, vector<8x32xf32> -> vector<8x32xf32>
    %58 = arith.addf %35, %57 : vector<8x32xf32>
    %59 = vector.extract_strided_slice %30 {offsets = [0, 8], sizes = [8, 8], strides = [1, 1]} : vector<8x16xbf16> to vector<8x8xbf16>
    %60 = vector.extract_strided_slice %31 {offsets = [8, 0], sizes = [8, 8], strides = [1, 1]} : vector<16x8xbf16> to vector<8x8xbf16>
    %61 = vector.extract_strided_slice %32 {offsets = [0, 8], sizes = [8, 8], strides = [1, 1]} : vector<8x16xbf16> to vector<8x8xbf16>
    %cst_42 = arith.constant dense<0.000000e+00> : vector<8x8xf32>
    %62 = tpu.matmul %59, %60, %cst_42 {dimension_numbers = #tpu.dot_dimension_numbers<[1], [0], [0], [1], [0, 0, 1, 1], [], []>} : vector<8x8xbf16>, vector<8x8xbf16>, vector<8x8xf32> -> vector<8x8xf32>
    %cst_43 = arith.constant dense<0xFF800000> : vector<8xf32>
    %63 = vector.multi_reduction <maximumf>, %62, %cst_43 [1] : vector<8x8xf32> to vector<8xf32>
    %64 = vector.shape_cast %63 : vector<8xf32> to vector<8x1xf32>
    %65 = vector.broadcast %64 : vector<8x1xf32> to vector<8x8xf32>
    %66 = arith.subf %62, %65 : vector<8x8xf32>
    %67 = math.exp %66 : vector<8x8xf32>
    %cst_44 = arith.constant dense<0.000000e+00> : vector<8xf32>
    %68 = vector.multi_reduction <add>, %67, %cst_44 [1] : vector<8x8xf32> to vector<8xf32>
    %69 = vector.shape_cast %68 : vector<8xf32> to vector<8x1xf32>
    %70 = tpu.reciprocal %69 {approx = true} : vector<8x1xf32> -> vector<8x1xf32>
    %71 = vector.broadcast %70 : vector<8x1xf32> to vector<8x8xf32>
    %72 = arith.mulf %67, %71 : vector<8x8xf32>
    %c0_45 = arith.constant 0 : index
    %c1 = arith.constant 1 : index
    %c0_46 = arith.constant 0 : index
    %c0_47 = arith.constant 0 : index
    %73 = vector.load %arg14[%c0_45, %c1, %c0_46, %c0_47] : memref<1x2x8x8xf32, #tpu.memory_space<vmem>>, vector<1x1x8x8xf32>
    %74 = vector.shape_cast %73 : vector<1x1x8x8xf32> to vector<8x8xf32>
    %75 = vector.shape_cast %72 : vector<8x8xf32> to vector<1x1x8x8xf32>
    tpu.vector_store %arg14[%c0_45, %c1, %c0_46, %c0_47], %75 {strides = array<i32>} : memref<1x2x8x8xf32, #tpu.memory_space<vmem>>, vector<1x1x8x8xf32>,
    %76 = arith.truncf %72 : vector<8x8xf32> to vector<8x8xbf16>
    %cst_48 = arith.constant dense<0.000000e+00> : vector<8x8xf32>
    %77 = tpu.matmul %76, %61, %cst_48 {dimension_numbers = #tpu.dot_dimension_numbers<[1], [0], [0], [1], [0, 0, 1, 1], [], []>} : vector<8x8xbf16>, vector<8x8xbf16>, vector<8x8xf32> -> vector<8x8xf32>
    %78 = arith.truncf %77 : vector<8x8xf32> to vector<8x8xbf16>
    %79 = vector.extract_strided_slice %34 {offsets = [8, 0], sizes = [8, 32], strides = [1, 1]} : vector<16x32xbf16> to vector<8x32xbf16>
    %cst_49 = arith.constant dense<0.000000e+00> : vector<8x32xf32>
    %80 = tpu.matmul %78, %79, %cst_49 {dimension_numbers = #tpu.dot_dimension_numbers<[1], [0], [0], [1], [0, 0, 1, 1], [], []>} : vector<8x8xbf16>, vector<8x32xbf16>, vector<8x32xf32> -> vector<8x32xf32>
    %81 = arith.addf %58, %80 : vector<8x32xf32>
    %c0_50 = arith.constant 0 : index
    %c0_51 = arith.constant 0 : index
    %c0_52 = arith.constant 0 : index
    %82 = vector.load %arg13[%c0_50, %c0_51, %c0_52] : memref<1x8x32xf32, #tpu.memory_space<vmem>>, vector<1x8x32xf32>
    %83 = vector.shape_cast %82 : vector<1x8x32xf32> to vector<8x32xf32>
    %84 = arith.addf %83, %81 : vector<8x32xf32>
    %c0_53 = arith.constant 0 : index
    %c0_54 = arith.constant 0 : index
    %c0_55 = arith.constant 0 : index
    %85 = vector.load %arg13[%c0_53, %c0_54, %c0_55] : memref<1x8x32xf32, #tpu.memory_space<vmem>>, vector<1x8x32xf32>
    %86 = vector.shape_cast %85 : vector<1x8x32xf32> to vector<8x32xf32>
    %87 = vector.shape_cast %84 : vector<8x32xf32> to vector<1x8x32xf32>
    tpu.vector_store %arg13[%c0_53, %c0_54, %c0_55], %87 {strides = array<i32>} : memref<1x8x32xf32, #tpu.memory_space<vmem>>, vector<1x8x32xf32>,
    return
  }
  func.func @transform_0(%arg0: i32, %arg1: i32) -> (i32, i32, i32) {
    %c0_i32 = arith.constant 0 : i32
    %c0_i32_0 = arith.constant 0 : i32
    %c0_i32_1 = arith.constant 0 : i32
    return %arg0, %c0_i32, %c0_i32_0 : i32, i32, i32
  }
  func.func @transform_1(%arg0: i32, %arg1: i32) -> (i32, i32, i32) {
    %c0_i32 = arith.constant 0 : i32
    %c0_i32_0 = arith.constant 0 : i32
    %c0_i32_1 = arith.constant 0 : i32
    return %arg0, %c0_i32, %c0_i32_0 : i32, i32, i32
  }
  func.func @transform_2(%arg0: i32, %arg1: i32) -> (i32, i32, i32) {
    %c0_i32 = arith.constant 0 : i32
    %c0_i32_0 = arith.constant 0 : i32
    %c0_i32_1 = arith.constant 0 : i32
    return %arg0, %c0_i32, %c0_i32_0 : i32, i32, i32
  }
  func.func @transform_3(%arg0: i32, %arg1: i32) -> (i32, i32, i32) {
    %c0_i32 = arith.constant 0 : i32
    %c0_i32_0 = arith.constant 0 : i32
    %c0_i32_1 = arith.constant 0 : i32
    return %arg1, %c0_i32, %c0_i32_0 : i32, i32, i32
  }
  func.func @transform_4(%arg0: i32, %arg1: i32) -> (i32, i32, i32) {
    %c0_i32 = arith.constant 0 : i32
    %c0_i32_0 = arith.constant 0 : i32
    %c0_i32_1 = arith.constant 0 : i32
    return %arg1, %c0_i32, %c0_i32_0 : i32, i32, i32
  }
  func.func @transform_5(%arg0: i32, %arg1: i32) -> (i32, i32, i32) {
    %c0_i32 = arith.constant 0 : i32
    %c0_i32_0 = arith.constant 0 : i32
    %c0_i32_1 = arith.constant 0 : i32
    return %arg1, %c0_i32, %c0_i32_0 : i32, i32, i32
  }
  func.func @transform_6(%arg0: i32, %arg1: i32) -> (i32, i32, i32) {
    %c0_i32 = arith.constant 0 : i32
    %c0_i32_0 = arith.constant 0 : i32
    %c0_i32_1 = arith.constant 0 : i32
    return %arg1, %c0_i32, %c0_i32_0 : i32, i32, i32
  }
  func.func @transform_7(%arg0: i32, %arg1: i32) -> (i32, i32, i32) {
    %c0_i32 = arith.constant 0 : i32
    %c0_i32_0 = arith.constant 0 : i32
    %c0_i32_1 = arith.constant 0 : i32
    return %arg1, %c0_i32, %c0_i32_0 : i32, i32, i32
  }
  func.func @transform_8(%arg0: i32, %arg1: i32) -> (i32, i32, i32) {
    %c0_i32 = arith.constant 0 : i32
    %c0_i32_0 = arith.constant 0 : i32
    %c0_i32_1 = arith.constant 0 : i32
    return %arg1, %c0_i32, %c0_i32_0 : i32, i32, i32
  }
  func.func @transform_9(%arg0: i32, %arg1: i32) -> (i32, i32, i32) {
    %c0_i32 = arith.constant 0 : i32
    %c0_i32_0 = arith.constant 0 : i32
    %c0_i32_1 = arith.constant 0 : i32
    return %arg1, %c0_i32, %c0_i32_0 : i32, i32, i32
  }
  func.func @transform_10(%arg0: i32, %arg1: i32) -> (i32, i32) {
    %c0_i32 = arith.constant 0 : i32
    %c0_i32_0 = arith.constant 0 : i32
    %c0_i32_1 = arith.constant 0 : i32
    return %c0_i32, %c0_i32_0 : i32, i32
  }
  func.func @transform_11(%arg0: i32, %arg1: i32) -> (i32, i32, i32) {
    %c0_i32 = arith.constant 0 : i32
    %c0_i32_0 = arith.constant 0 : i32
    %c0_i32_1 = arith.constant 0 : i32
    return %arg0, %c0_i32, %c0_i32_0 : i32, i32, i32
  }
  func.func @transform_12(%arg0: i32, %arg1: i32) -> (i32, i32, i32, i32) {
    %c0_i32 = arith.constant 0 : i32
    %c0_i32_0 = arith.constant 0 : i32
    %c0_i32_1 = arith.constant 0 : i32
    return %arg0, %arg1, %c0_i32, %c0_i32_0 : i32, i32, i32, i32
  }
}

</mosaic_0001>

<llo_original>
// kernel: tpu_custom_call.1
$region0: #{tpu_custom_call.1}
  #allocation0 [shape = 'u32[]', space=smem, size = 0x4, offset = 0x4, fixed_abs, tag = 'smem constant byte address 0x4 - core index']
  #allocation1 [shape = 'u32[72,128]{1,0:T(1,128)}', space=vmem, size = 0x9000, scoped, tag = 'internal scratch']
  %s0 = inlined_call_operand.vmem [shape: bf16[2,8,32], index: 0, kind: input, shape index: {}]
  %s1 = inlined_call_operand.vmem [shape: bf16[2,32,8], index: 1, kind: input, shape index: {}]
  %s2 = inlined_call_operand.vmem [shape: bf16[2,8,32], index: 2, kind: input, shape index: {}]
  %s3 = inlined_call_operand.vmem [shape: bf16[2,32,16], index: 3, kind: input, shape index: {}]
  %s4 = inlined_call_operand.vmem [shape: f32[2,1,16], index: 4, kind: input, shape index: {}]
  %s5 = inlined_call_operand.vmem [shape: bf16[2,16,32], index: 5, kind: input, shape index: {}]
  %s6 = inlined_call_operand.vmem [shape: f32[2,16,1], index: 6, kind: input, shape index: {}]
  %s7 = inlined_call_operand.vmem [shape: bf16[2,32,16], index: 7, kind: input, shape index: {}]
  %s8 = inlined_call_operand.vmem [shape: f32[2,1,16], index: 8, kind: input, shape index: {}]
  %s9 = inlined_call_operand.vmem [shape: bf16[2,16,32], index: 9, kind: input, shape index: {}]
  %s10 = inlined_call_operand.vmem [shape: f32[1,32], index: 10, kind: input, shape index: {}]
  %s11 = inlined_call_operand.hbm [shape: f32[2,8,32], index: 11, kind: output, shape index: {0}]
  %s12 = inlined_call_operand.hbm [shape: f32[2,4,8,8], index: 12, kind: output, shape index: {1}]
  %13 = xla_tuple %s11, %s12
  %s14 = sld [smem:[#allocation0]]
  $region89: #{tpu_custom_call.1} parent=0
    _
  %s16 = ssub.s32 1, %s14
  %s17 = scalar_select 0, %s16, %s14
  $region1: #{tpu_custom_call.1} parent=0
    #allocation2 [shape = 'u8[8192]{0}', space=vmem, size = 0x2000, scoped, tag = 'output window, operand 0']
    #allocation3 [shape = 's32[2]{0}', space=sflag, size = 0x8, scoped, tag = 'scoped memory for tpu_custom_call.1']
    #allocation4 [shape = 'u8[16384]{0}', space=vmem, size = 0x4000, scoped, tag = 'output window, operand 1']
    #allocation5 [shape = 's32[2]{0}', space=sflag, size = 0x8, scoped, tag = 'scoped memory for tpu_custom_call.1']
    %18 = vsyncpa [#allocation3], 0
    %s19 = scalar_lea.sflag [#allocation3], 1
    %20 = vsyncpa %s19, 0
    %21 = vsyncpa [#allocation5], 0
    %s22 = scalar_lea.sflag [#allocation5], 1
    %23 = vsyncpa %s22, 0
    loop: start=0, step=1, limit=6
    $region2: #{tpu_custom_call.1} parent=1 // loop_pre_header
      _
    $region3: #{tpu_custom_call.1} parent=1 // loop_header
      %s25 = sphi 0, %s29
      %p26 = scmp.ge.s32.totalorder %s25, 6
      %s32 = sphi 0, %s44
      %s33 = sphi 0, %s40
      %s34 = sphi 0, %s32
      %s35 = sphi 0, %s33
      %s36 = sphi 0, %s34
      %s37 = sphi 0, %s35
      %s47 = sphi 0, %s49
      %s50 = sphi 0, %s47
      %s51 = sphi 0, %s50
      %s67 = sphi 0, %s51
      %s73 = sphi 0, %s75
      %s76 = sphi 0, %s73
      %s77 = sphi 0, %s76
      %s93 = sphi 0, %s77
      %s99 = sphi 0, %s101
      %s102 = sphi 0, %s99
      %s103 = sphi 0, %s102
      %s119 = sphi 0, %s103
      %s125 = sphi 0, %s127
      %s128 = sphi 0, %s125
      %s129 = sphi 0, %s128
      %s145 = sphi 0, %s129
      %s151 = sphi 0, %s153
      %s154 = sphi 0, %s151
      %s155 = sphi 0, %s154
      %s171 = sphi 0, %s155
      %s177 = sphi 0, %s179
      %s180 = sphi 0, %s177
      %s181 = sphi 0, %s180
      %s197 = sphi 0, %s181
      %s203 = sphi 0, %s205
      %s206 = sphi 0, %s203
      %s207 = sphi 0, %s206
      %s223 = sphi 0, %s207
      %s229 = sphi 0, %s231
      %s232 = sphi 0, %s229
      %s233 = sphi 0, %s232
      %s249 = sphi 0, %s233
      %s255 = sphi 0, %s257
      %s258 = sphi 0, %s255
      %s259 = sphi 0, %s258
      %s275 = sphi 0, %s259
      %s281 = sphi 0, %s283
      %s284 = sphi 0, %s281
      %s285 = sphi 0, %s284
      %s301 = sphi 0, %s285
      %s305 = sphi 0, %s305
      %s307 = sphi 0, %s305
      %s308 = sphi 0, %s307
      %s322 = sphi 0, %s308
      %s328 = sphi 0, %s330
      %s331 = sphi 0, %s328
      %s332 = sphi 0, %s331
      %s348 = sphi 0, %s332
      %s356 = sphi 0, %s358
      %s359 = sphi 0, %s356
      %s360 = sphi 0, %s359
      %s376 = sphi 0, %s360
    $region4: #{tpu_custom_call.1} parent=1 // loop_header_branch
      %28 = sbr.rel (%p26) target = $region8
    $region5: #{tpu_custom_call.1} parent=1 // loop_body
      %s30 = ssub.s32 %s25, 1
      %s31 = ssub.s32 %s25, 2
      %s38 = sadd.s32 1, %s33
      %p39 = scmp.ge.s32.totalorder %s38, 2
      %s40 = scalar_select %p39, 0, %s38
      %s41 = sadd.s32 1, %s32
      %s42 = scalar_select %p39, %s41, %s32
      %p43 = scmp.ge.s32.totalorder %s42, 2
      %s44 = scalar_select %p43, 0, %s42
      %s45 = ssub.s32 %s32, %s44
      %p46 = scmp.eq.s32.totalorder %s45, 0
      %s48 = sadd.s32 %s47, 1
      %s49 = scalar_select %p46, %s47, %s48
      %p52 = pneg %p46
      %p53 = scmp.eq.s32.totalorder %s25, 3
      %p54 = por %p52, %p53
      %p55 = scmp.ne.s32.totalorder %s47, %s50
      %p56 = scmp.eq.s32.totalorder %s25, 0
      %p57 = por %p55, %p56
      %p58 = scmp.ne.s32.totalorder %s47, %s50
      %p59 = scmp.eq.s32.totalorder %s30, 3
      %p60 = por %p58, %p59
      %p61 = scmp.ne.s32.totalorder %s50, %s51
      %p62 = scmp.eq.s32.totalorder %s30, 0
      %p63 = por %p61, %p62
      %p64 = scmp.ne.s32.totalorder %s50, %s51
      %p65 = scmp.eq.s32.totalorder %s31, 3
      %p66 = por %p64, %p65
      %p68 = scmp.ne.s32.totalorder %s51, %s67
      %p69 = scmp.eq.s32.totalorder %s31, 0
      %p70 = por %p68, %p69
      %s71 = ssub.s32 %s32, %s44
      %p72 = scmp.eq.s32.totalorder %s71, 0
      %s74 = sadd.s32 %s73, 1
      %s75 = scalar_select %p72, %s73, %s74
      %p78 = pneg %p72
      %p79 = scmp.eq.s32.totalorder %s25, 3
      %p80 = por %p78, %p79
      %p81 = scmp.ne.s32.totalorder %s73, %s76
      %p82 = scmp.eq.s32.totalorder %s25, 0
      %p83 = por %p81, %p82
      %p84 = scmp.ne.s32.totalorder %s73, %s76
      %p85 = scmp.eq.s32.totalorder %s30, 3
      %p86 = por %p84, %p85
      %p87 = scmp.ne.s32.totalorder %s76, %s77
      %p88 = scmp.eq.s32.totalorder %s30, 0
      %p89 = por %p87, %p88
      %p90 = scmp.ne.s32.totalorder %s76, %s77
      %p91 = scmp.eq.s32.totalorder %s31, 3
      %p92 = por %p90, %p91
      %p94 = scmp.ne.s32.totalorder %s77, %s93
      %p95 = scmp.eq.s32.totalorder %s31, 0
      %p96 = por %p94, %p95
      %s97 = ssub.s32 %s32, %s44
      %p98 = scmp.eq.s32.totalorder %s97, 0
      %s100 = sadd.s32 %s99, 1
      %s101 = scalar_select %p98, %s99, %s100
      %p104 = pneg %p98
      %p105 = scmp.eq.s32.totalorder %s25, 3
      %p106 = por %p104, %p105
      %p107 = scmp.ne.s32.totalorder %s99, %s102
      %p108 = scmp.eq.s32.totalorder %s25, 0
      %p109 = por %p107, %p108
      %p110 = scmp.ne.s32.totalorder %s99, %s102
      %p111 = scmp.eq.s32.totalorder %s30, 3
      %p112 = por %p110, %p111
      %p113 = scmp.ne.s32.totalorder %s102, %s103
      %p114 = scmp.eq.s32.totalorder %s30, 0
      %p115 = por %p113, %p114
      %p116 = scmp.ne.s32.totalorder %s102, %s103
      %p117 = scmp.eq.s32.totalorder %s31, 3
      %p118 = por %p116, %p117
      %p120 = scmp.ne.s32.totalorder %s103, %s119
      %p121 = scmp.eq.s32.totalorder %s31, 0
      %p122 = por %p120, %p121
      %s123 = ssub.s32 %s33, %s40
      %p124 = scmp.eq.s32.totalorder %s123, 0
      %s126 = sadd.s32 %s125, 1
      %s127 = scalar_select %p124, %s125, %s126
      %p130 = pneg %p124
      %p131 = scmp.eq.s32.totalorder %s25, 3
      %p132 = por %p130, %p131
      %p133 = scmp.ne.s32.totalorder %s125, %s128
      %p134 = scmp.eq.s32.totalorder %s25, 0
      %p135 = por %p133, %p134
      %p136 = scmp.ne.s32.totalorder %s125, %s128
      %p137 = scmp.eq.s32.totalorder %s30, 3
      %p138 = por %p136, %p137
      %p139 = scmp.ne.s32.totalorder %s128, %s129
      %p140 = scmp.eq.s32.totalorder %s30, 0
      %p141 = por %p139, %p140
      %p142 = scmp.ne.s32.totalorder %s128, %s129
      %p143 = scmp.eq.s32.totalorder %s31, 3
      %p144 = por %p142, %p143
      %p146 = scmp.ne.s32.totalorder %s129, %s145
      %p147 = scmp.eq.s32.totalorder %s31, 0
      %p148 = por %p146, %p147
      %s149 = ssub.s32 %s33, %s40
      %p150 = scmp.eq.s32.totalorder %s149, 0
      %s152 = sadd.s32 %s151, 1
      %s153 = scalar_select %p150, %s151, %s152
      %p156 = pneg %p150
      %p157 = scmp.eq.s32.totalorder %s25, 3
      %p158 = por %p156, %p157
      %p159 = scmp.ne.s32.totalorder %s151, %s154
      %p160 = scmp.eq.s32.totalorder %s25, 0
      %p161 = por %p159, %p160
      %p162 = scmp.ne.s32.totalorder %s151, %s154
      %p163 = scmp.eq.s32.totalorder %s30, 3
      %p164 = por %p162, %p163
      %p165 = scmp.ne.s32.totalorder %s154, %s155
      %p166 = scmp.eq.s32.totalorder %s30, 0
      %p167 = por %p165, %p166
      %p168 = scmp.ne.s32.totalorder %s154, %s155
      %p169 = scmp.eq.s32.totalorder %s31, 3
      %p170 = por %p168, %p169
      %p172 = scmp.ne.s32.totalorder %s155, %s171
      %p173 = scmp.eq.s32.totalorder %s31, 0
      %p174 = por %p172, %p173
      %s175 = ssub.s32 %s33, %s40
      %p176 = scmp.eq.s32.totalorder %s175, 0
      %s178 = sadd.s32 %s177, 1
      %s179 = scalar_select %p176, %s177, %s178
      %p182 = pneg %p176
      %p183 = scmp.eq.s32.totalorder %s25, 3
      %p184 = por %p182, %p183
      %p185 = scmp.ne.s32.totalorder %s177, %s180
      %p186 = scmp.eq.s32.totalorder %s25, 0
      %p187 = por %p185, %p186
      %p188 = scmp.ne.s32.totalorder %s177, %s180
      %p189 = scmp.eq.s32.totalorder %s30, 3
      %p190 = por %p188, %p189
      %p191 = scmp.ne.s32.totalorder %s180, %s181
      %p192 = scmp.eq.s32.totalorder %s30, 0
      %p193 = por %p191, %p192
      %p194 = scmp.ne.s32.totalorder %s180, %s181
      %p195 = scmp.eq.s32.totalorder %s31, 3
      %p196 = por %p194, %p195
      %p198 = scmp.ne.s32.totalorder %s181, %s197
      %p199 = scmp.eq.s32.totalorder %s31, 0
      %p200 = por %p198, %p199
      %s201 = ssub.s32 %s33, %s40
      %p202 = scmp.eq.s32.totalorder %s201, 0
      %s204 = sadd.s32 %s203, 1
      %s205 = scalar_select %p202, %s203, %s204
      %p208 = pneg %p202
      %p209 = scmp.eq.s32.totalorder %s25, 3
      %p210 = por %p208, %p209
      %p211 = scmp.ne.s32.totalorder %s203, %s206
      %p212 = scmp.eq.s32.totalorder %s25, 0
      %p213 = por %p211, %p212
      %p214 = scmp.ne.s32.totalorder %s203, %s206
      %p215 = scmp.eq.s32.totalorder %s30, 3
      %p216 = por %p214, %p215
      %p217 = scmp.ne.s32.totalorder %s206, %s207
      %p218 = scmp.eq.s32.totalorder %s30, 0
      %p219 = por %p217, %p218
      %p220 = scmp.ne.s32.totalorder %s206, %s207
      %p221 = scmp.eq.s32.totalorder %s31, 3
      %p222 = por %p220, %p221
      %p224 = scmp.ne.s32.totalorder %s207, %s223
      %p225 = scmp.eq.s32.totalorder %s31, 0
      %p226 = por %p224, %p225
      %s227 = ssub.s32 %s33, %s40
      %p228 = scmp.eq.s32.totalorder %s227, 0
      %s230 = sadd.s32 %s229, 1
      %s231 = scalar_select %p228, %s229, %s230
      %p234 = pneg %p228
      %p235 = scmp.eq.s32.totalorder %s25, 3
      %p236 = por %p234, %p235
      %p237 = scmp.ne.s32.totalorder %s229, %s232
      %p238 = scmp.eq.s32.totalorder %s25, 0
      %p239 = por %p237, %p238
      %p240 = scmp.ne.s32.totalorder %s229, %s232
      %p241 = scmp.eq.s32.totalorder %s30, 3
      %p242 = por %p240, %p241
      %p243 = scmp.ne.s32.totalorder %s232, %s233
      %p244 = scmp.eq.s32.totalorder %s30, 0
      %p245 = por %p243, %p244
      %p246 = scmp.ne.s32.totalorder %s232, %s233
      %p247 = scmp.eq.s32.totalorder %s31, 3
      %p248 = por %p246, %p247
      %p250 = scmp.ne.s32.totalorder %s233, %s249
      %p251 = scmp.eq.s32.totalorder %s31, 0
      %p252 = por %p250, %p251
      %s253 = ssub.s32 %s33, %s40
      %p254 = scmp.eq.s32.totalorder %s253, 0
      %s256 = sadd.s32 %s255, 1
      %s257 = scalar_select %p254, %s255, %s256
      %p260 = pneg %p254
      %p261 = scmp.eq.s32.totalorder %s25, 3
      %p262 = por %p260, %p261
      %p263 = scmp.ne.s32.totalorder %s255, %s258
      %p264 = scmp.eq.s32.totalorder %s25, 0
      %p265 = por %p263, %p264
      %p266 = scmp.ne.s32.totalorder %s255, %s258
      %p267 = scmp.eq.s32.totalorder %s30, 3
      %p268 = por %p266, %p267
      %p269 = scmp.ne.s32.totalorder %s258, %s259
      %p270 = scmp.eq.s32.totalorder %s30, 0
      %p271 = por %p269, %p270
      %p272 = scmp.ne.s32.totalorder %s258, %s259
      %p273 = scmp.eq.s32.totalorder %s31, 3
      %p274 = por %p272, %p273
      %p276 = scmp.ne.s32.totalorder %s259, %s275
      %p277 = scmp.eq.s32.totalorder %s31, 0
      %p278 = por %p276, %p277
      %s279 = ssub.s32 %s33, %s40
      %p280 = scmp.eq.s32.totalorder %s279, 0
      %s282 = sadd.s32 %s281, 1
      %s283 = scalar_select %p280, %s281, %s282
      %p286 = pneg %p280
      %p287 = scmp.eq.s32.totalorder %s25, 3
      %p288 = por %p286, %p287
      %p289 = scmp.ne.s32.totalorder %s281, %s284
      %p290 = scmp.eq.s32.totalorder %s25, 0
      %p291 = por %p289, %p290
      %p292 = scmp.ne.s32.totalorder %s281, %s284
      %p293 = scmp.eq.s32.totalorder %s30, 3
      %p294 = por %p292, %p293
      %p295 = scmp.ne.s32.totalorder %s284, %s285
      %p296 = scmp.eq.s32.totalorder %s30, 0
      %p297 = por %p295, %p296
      %p298 = scmp.ne.s32.totalorder %s284, %s285
      %p299 = scmp.eq.s32.totalorder %s31, 3
      %p300 = por %p298, %p299
      %p302 = scmp.ne.s32.totalorder %s285, %s301
      %p303 = scmp.eq.s32.totalorder %s31, 0
      %p304 = por %p302, %p303
      %s306 = sadd.s32 %s305, 1
      %p309 = scmp.eq.s32.totalorder %s25, 3
      %p310 = scmp.ne.s32.totalorder %s305, %s307
      %p311 = scmp.eq.s32.totalorder %s25, 0
      %p312 = por %p310, %p311
      %p313 = scmp.ne.s32.totalorder %s305, %s307
      %p314 = scmp.eq.s32.totalorder %s30, 3
      %p315 = por %p313, %p314
      %p316 = scmp.ne.s32.totalorder %s307, %s308
      %p317 = scmp.eq.s32.totalorder %s30, 0
      %p318 = por %p316, %p317
      %p319 = scmp.ne.s32.totalorder %s307, %s308
      %p320 = scmp.eq.s32.totalorder %s31, 3
      %p321 = por %p319, %p320
      %p323 = scmp.ne.s32.totalorder %s308, %s322
      %p324 = scmp.eq.s32.totalorder %s31, 0
      %p325 = por %p323, %p324
      %s326 = ssub.s32 %s32, %s44
      %p327 = scmp.eq.s32.totalorder %s326, 0
      %s329 = sadd.s32 %s328, 1
      %s330 = scalar_select %p327, %s328, %s329
      %p333 = pneg %p327
      %p334 = scmp.eq.s32.totalorder %s25, 3
      %p335 = por %p333, %p334
      %p336 = scmp.ne.s32.totalorder %s328, %s331
      %p337 = scmp.eq.s32.totalorder %s25, 0
      %p338 = por %p336, %p337
      %p339 = scmp.ne.s32.totalorder %s328, %s331
      %p340 = scmp.eq.s32.totalorder %s30, 3
      %p341 = por %p339, %p340
      %p342 = scmp.ne.s32.totalorder %s331, %s332
      %p343 = scmp.eq.s32.totalorder %s30, 0
      %p344 = por %p342, %p343
      %p345 = scmp.ne.s32.totalorder %s331, %s332
      %p346 = scmp.eq.s32.totalorder %s31, 3
      %p347 = por %p345, %p346
      %p349 = scmp.ne.s32.totalorder %s332, %s348
      %p350 = scmp.eq.s32.totalorder %s31, 0
      %p351 = por %p349, %p350
      %s352 = ssub.s32 %s32, %s44
      %s353 = ssub.s32 %s33, %s40
      %s354 = sor.u32 %s352, %s353
      %p355 = scmp.eq.s32.totalorder %s354, 0
      %s357 = sadd.s32 %s356, 1
      %s358 = scalar_select %p355, %s356, %s357
      %p361 = pneg %p355
      %p362 = scmp.eq.s32.totalorder %s25, 3
      %p363 = por %p361, %p362
      %p364 = scmp.ne.s32.totalorder %s356, %s359
      %p365 = scmp.eq.s32.totalorder %s25, 0
      %p366 = por %p364, %p365
      %p367 = scmp.ne.s32.totalorder %s356, %s359
      %p368 = scmp.eq.s32.totalorder %s30, 3
      %p369 = por %p367, %p368
      %p370 = scmp.ne.s32.totalorder %s359, %s360
      %p371 = scmp.eq.s32.totalorder %s30, 0
      %p372 = por %p370, %p371
      %p373 = scmp.ne.s32.totalorder %s359, %s360
      %p374 = scmp.eq.s32.totalorder %s31, 3
      %p375 = por %p373, %p374
      %p377 = scmp.ne.s32.totalorder %s360, %s376
      %p378 = scmp.eq.s32.totalorder %s31, 0
      %p379 = por %p377, %p378
      %p380 = scmp.le.s32.totalorder 1, %s25
      %p381 = scmp.lt.s32.totalorder %s25, 5
      %p382 = pnand %p380, %p381
      %p383 = pneg %p382
      // Predicated region
      $region9: #{tpu_custom_call.1} parent=5 // pred_check
        _
      $region10: #{tpu_custom_call.1} parent=5 // pred_check_branch
        %385 = sbr.rel (%p382) target = $region12
      $region11: #{tpu_custom_call.1} parent=5 // pred_region
        %s386 = ssub.s32 %s25, 1
        // Predicated region
        $region13: #{tpu_custom_call.1} parent=11 // pred_check
          %p387 = pneg %p318
        $region14: #{tpu_custom_call.1} parent=11 // pred_check_branch
          %389 = sbr.rel (%p387) target = $region16
        $region15: #{tpu_custom_call.1} parent=11 // pred_region
          _
        $region16: #{tpu_custom_call.1} parent=11 // pred_fallthru
          _
      $region12: #{tpu_custom_call.1} parent=5 // pred_fallthru
        _
      %p390 = scmp.lt.s32.totalorder %s25, 4
      // Predicated region
      $region17: #{tpu_custom_call.1} parent=5 // pred_check
        %p391 = pneg %p390
      $region18: #{tpu_custom_call.1} parent=5 // pred_check_branch
        %393 = sbr.rel (%p391) target = $region20
      $region19: #{tpu_custom_call.1} parent=5 // pred_region
        // Predicated region
        $region21: #{tpu_custom_call.1} parent=19 // pred_check
          %p394 = pneg %p57
        $region22: #{tpu_custom_call.1} parent=19 // pred_check_branch
          %396 = sbr.rel (%p394) target = $region24
        $region23: #{tpu_custom_call.1} parent=19 // pred_region
          %p397 = scmp.lt.s32.totalorder %s32, 1
          %s398 = scalar_select %p397, %s32, 1
          %s399 = smul.addr %s398, 4
          %s400 = scalar_lea.vmem %s0, %s399
        $region24: #{tpu_custom_call.1} parent=19 // pred_fallthru
          _
        // Predicated region
        $region25: #{tpu_custom_call.1} parent=19 // pred_check
          %p401 = pneg %p83
        $region26: #{tpu_custom_call.1} parent=19 // pred_check_branch
          %403 = sbr.rel (%p401) target = $region28
        $region27: #{tpu_custom_call.1} parent=19 // pred_region
          %p404 = scmp.lt.s32.totalorder %s32, 1
          %s405 = scalar_select %p404, %s32, 1
          %s406 = smul.addr %s405, 4
          %s407 = smul.addr %s406, 4
          %s408 = scalar_lea.vmem %s1, %s407
        $region28: #{tpu_custom_call.1} parent=19 // pred_fallthru
          _
        // Predicated region
        $region29: #{tpu_custom_call.1} parent=19 // pred_check
          %p409 = pneg %p109
        $region30: #{tpu_custom_call.1} parent=19 // pred_check_branch
          %411 = sbr.rel (%p409) target = $region32
        $region31: #{tpu_custom_call.1} parent=19 // pred_region
          %p412 = scmp.lt.s32.totalorder %s32, 1
          %s413 = scalar_select %p412, %s32, 1
          %s414 = smul.addr %s413, 4
          %s415 = scalar_lea.vmem %s2, %s414
        $region32: #{tpu_custom_call.1} parent=19 // pred_fallthru
          _
        // Predicated region
        $region33: #{tpu_custom_call.1} parent=19 // pred_check
          %p416 = pneg %p135
        $region34: #{tpu_custom_call.1} parent=19 // pred_check_branch
          %418 = sbr.rel (%p416) target = $region36
        $region35: #{tpu_custom_call.1} parent=19 // pred_region
          %p419 = scmp.lt.s32.totalorder %s33, 1
          %s420 = scalar_select %p419, %s33, 1
          %s421 = smul.addr %s420, 4
          %s422 = smul.addr %s421, 4
          %s423 = scalar_lea.vmem %s3, %s422
        $region36: #{tpu_custom_call.1} parent=19 // pred_fallthru
          _
        // Predicated region
        $region37: #{tpu_custom_call.1} parent=19 // pred_check
          %p424 = pneg %p161
        $region38: #{tpu_custom_call.1} parent=19 // pred_check_branch
          %426 = sbr.rel (%p424) target = $region40
        $region39: #{tpu_custom_call.1} parent=19 // pred_region
          %p427 = scmp.lt.s32.totalorder %s33, 1
          %s428 = scalar_select %p427, %s33, 1
          %s429 = scalar_lea.vmem %s4, %s428
        $region40: #{tpu_custom_call.1} parent=19 // pred_fallthru
          _
        // Predicated region
        $region41: #{tpu_custom_call.1} parent=19 // pred_check
          %p430 = pneg %p187
        $region42: #{tpu_custom_call.1} parent=19 // pred_check_branch
          %432 = sbr.rel (%p430) target = $region44
        $region43: #{tpu_custom_call.1} parent=19 // pred_region
          %p433 = scmp.lt.s32.totalorder %s33, 1
          %s434 = scalar_select %p433, %s33, 1
          %s435 = smul.addr %s434, 2
          %s436 = smul.addr %s435, 4
          %s437 = scalar_lea.vmem %s5, %s436
        $region44: #{tpu_custom_call.1} parent=19 // pred_fallthru
          _
        // Predicated region
        $region45: #{tpu_custom_call.1} parent=19 // pred_check
          %p438 = pneg %p213
        $region46: #{tpu_custom_call.1} parent=19 // pred_check_branch
          %440 = sbr.rel (%p438) target = $region48
        $region47: #{tpu_custom_call.1} parent=19 // pred_region
          %p441 = scmp.lt.s32.totalorder %s33, 1
          %s442 = scalar_select %p441, %s33, 1
          %s443 = smul.addr %s442, 2
          %s444 = smul.addr %s443, 8
          %s445 = scalar_lea.vmem %s6, %s444
        $region48: #{tpu_custom_call.1} parent=19 // pred_fallthru
          _
        // Predicated region
        $region49: #{tpu_custom_call.1} parent=19 // pred_check
          %p446 = pneg %p239
        $region50: #{tpu_custom_call.1} parent=19 // pred_check_branch
          %448 = sbr.rel (%p446) target = $region52
        $region51: #{tpu_custom_call.1} parent=19 // pred_region
          %p449 = scmp.lt.s32.totalorder %s33, 1
          %s450 = scalar_select %p449, %s33, 1
          %s451 = smul.addr %s450, 4
          %s452 = smul.addr %s451, 4
          %s453 = scalar_lea.vmem %s7, %s452
        $region52: #{tpu_custom_call.1} parent=19 // pred_fallthru
          _
        // Predicated region
        $region53: #{tpu_custom_call.1} parent=19 // pred_check
          %p454 = pneg %p265
        $region54: #{tpu_custom_call.1} parent=19 // pred_check_branch
          %456 = sbr.rel (%p454) target = $region56
        $region55: #{tpu_custom_call.1} parent=19 // pred_region
          %p457 = scmp.lt.s32.totalorder %s33, 1
          %s458 = scalar_select %p457, %s33, 1
          %s459 = scalar_lea.vmem %s8, %s458
        $region56: #{tpu_custom_call.1} parent=19 // pred_fallthru
          _
        // Predicated region
        $region57: #{tpu_custom_call.1} parent=19 // pred_check
          %p460 = pneg %p291
        $region58: #{tpu_custom_call.1} parent=19 // pred_check_branch
          %462 = sbr.rel (%p460) target = $region60
        $region59: #{tpu_custom_call.1} parent=19 // pred_region
          %p463 = scmp.lt.s32.totalorder %s33, 1
          %s464 = scalar_select %p463, %s33, 1
          %s465 = smul.addr %s464, 2
          %s466 = smul.addr %s465, 4
          %s467 = scalar_lea.vmem %s9, %s466
        $region60: #{tpu_custom_call.1} parent=19 // pred_fallthru
          _
      $region20: #{tpu_custom_call.1} parent=5 // pred_fallthru
        _
      %p468 = scmp.le.s32.totalorder 1, %s25
      %p469 = scmp.lt.s32.totalorder %s25, 5
      %p470 = pnand %p468, %p469
      %p471 = pneg %p470
      // Predicated region
      $region61: #{tpu_custom_call.1} parent=5 // pred_check
        _
      $region62: #{tpu_custom_call.1} parent=5 // pred_check_branch
        %473 = sbr.rel (%p470) target = $region64
      $region63: #{tpu_custom_call.1} parent=5 // pred_region
        %s474 = ssub.s32 %s25, 1
        %p475 = scmp.lt.s32.totalorder %s34, 1
        %s476 = scalar_select %p475, %s34, 1
        %s477 = smul.addr %s476, 4
        %s478 = scalar_lea.vmem %s0, %s477
        %p479 = pneg %p63
        %p480 = pneg %p60
        %p481 = scmp.lt.s32.totalorder %s34, 1
        %s482 = scalar_select %p481, %s34, 1
        %s483 = smul.addr %s482, 4
        %s484 = smul.addr %s483, 4
        %s485 = scalar_lea.vmem %s1, %s484
        %p486 = pneg %p89
        %p487 = pneg %p86
        %p488 = scmp.lt.s32.totalorder %s34, 1
        %s489 = scalar_select %p488, %s34, 1
        %s490 = smul.addr %s489, 4
        %s491 = scalar_lea.vmem %s2, %s490
        %p492 = pneg %p115
        %p493 = pneg %p112
        %p494 = scmp.lt.s32.totalorder %s35, 1
        %s495 = scalar_select %p494, %s35, 1
        %s496 = smul.addr %s495, 4
        %s497 = smul.addr %s496, 4
        %s498 = scalar_lea.vmem %s3, %s497
        %p499 = pneg %p141
        %p500 = pneg %p138
        %p501 = scmp.lt.s32.totalorder %s35, 1
        %s502 = scalar_select %p501, %s35, 1
        %s503 = scalar_lea.vmem %s4, %s502
        %p504 = pneg %p167
        %p505 = pneg %p164
        %p506 = scmp.lt.s32.totalorder %s35, 1
        %s507 = scalar_select %p506, %s35, 1
        %s508 = smul.addr %s507, 2
        %s509 = smul.addr %s508, 4
        %s510 = scalar_lea.vmem %s5, %s509
        %p511 = pneg %p193
        %p512 = pneg %p190
        %p513 = scmp.lt.s32.totalorder %s35, 1
        %s514 = scalar_select %p513, %s35, 1
        %s515 = smul.addr %s514, 2
        %s516 = smul.addr %s515, 8
        %s517 = scalar_lea.vmem %s6, %s516
        %p518 = pneg %p219
        %p519 = pneg %p216
        %p520 = scmp.lt.s32.totalorder %s35, 1
        %s521 = scalar_select %p520, %s35, 1
        %s522 = smul.addr %s521, 4
        %s523 = smul.addr %s522, 4
        %s524 = scalar_lea.vmem %s7, %s523
        %p525 = pneg %p245
        %p526 = pneg %p242
        %p527 = scmp.lt.s32.totalorder %s35, 1
        %s528 = scalar_select %p527, %s35, 1
        %s529 = scalar_lea.vmem %s8, %s528
        %p530 = pneg %p271
        %p531 = pneg %p268
        %p532 = scmp.lt.s32.totalorder %s35, 1
        %s533 = scalar_select %p532, %s35, 1
        %s534 = smul.addr %s533, 2
        %s535 = smul.addr %s534, 4
        %s536 = scalar_lea.vmem %s9, %s535
        %p537 = pneg %p297
        %p538 = pneg %p294
        %p539 = pneg %p318
        %p540 = pneg %p315
        %p541 = pneg %p344
        %p542 = pneg %p341
        %s543 = sand.u32 %s331, 1
        %s544 = scalar_lea.sflag [#allocation3], %s543
        %s545 = sand.u32 %s331, 1
        %s546 = smul.addr %s545, 8
        %s547 = scalar_lea.vmem [#allocation2], %s546
        %p548 = pneg %p372
        %p549 = pneg %p369
        %s550 = sand.u32 %s359, 1
        %s551 = scalar_lea.sflag [#allocation5], %s550
        %s552 = sand.u32 %s359, 1
        %s553 = smul.addr %s552, 16
        %s554 = scalar_lea.vmem [#allocation4], %s553
        %p555 = scmp.lt.s32.totalorder %s34, 1
        %s556 = scalar_select %p555, %s34, 1
        %s557 = smul.addr %s556, 4
        %s558 = scalar_lea.vmem %s0, %s557
        %p559 = scmp.lt.s32.totalorder %s34, 1
        %s560 = scalar_select %p559, %s34, 1
        %s561 = smul.addr %s560, 4
        %s562 = smul.addr %s561, 4
        %s563 = scalar_lea.vmem %s1, %s562
        %p564 = scmp.lt.s32.totalorder %s34, 1
        %s565 = scalar_select %p564, %s34, 1
        %s566 = smul.addr %s565, 4
        %s567 = scalar_lea.vmem %s2, %s566
        %p568 = scmp.lt.s32.totalorder %s35, 1
        %s569 = scalar_select %p568, %s35, 1
        %s570 = smul.addr %s569, 4
        %s571 = smul.addr %s570, 4
        %s572 = scalar_lea.vmem %s3, %s571
        %p573 = scmp.lt.s32.totalorder %s35, 1
        %s574 = scalar_select %p573, %s35, 1
        %s575 = scalar_lea.vmem %s4, %s574
        %p576 = scmp.lt.s32.totalorder %s35, 1
        %s577 = scalar_select %p576, %s35, 1
        %s578 = smul.addr %s577, 2
        %s579 = smul.addr %s578, 4
        %s580 = scalar_lea.vmem %s5, %s579
        %p581 = scmp.lt.s32.totalorder %s35, 1
        %s582 = scalar_select %p581, %s35, 1
        %s583 = smul.addr %s582, 2
        %s584 = smul.addr %s583, 8
        %s585 = scalar_lea.vmem %s6, %s584
        %p586 = scmp.lt.s32.totalorder %s35, 1
        %s587 = scalar_select %p586, %s35, 1
        %s588 = smul.addr %s587, 4
        %s589 = smul.addr %s588, 4
        %s590 = scalar_lea.vmem %s7, %s589
        %p591 = scmp.lt.s32.totalorder %s35, 1
        %s592 = scalar_select %p591, %s35, 1
        %s593 = scalar_lea.vmem %s8, %s592
        %p594 = scmp.lt.s32.totalorder %s35, 1
        %s595 = scalar_select %p594, %s35, 1
        %s596 = smul.addr %s595, 2
        %s597 = smul.addr %s596, 4
        %s598 = scalar_lea.vmem %s9, %s597
        %s599 = smul.u32 2, %s35
        %p601 = scmp.eq.s32.totalorder %s35, 0
        // Predicated region
        $region65: #{tpu_custom_call.1} parent=63 // pred_check
          %p602 = pneg %p601
        $region66: #{tpu_custom_call.1} parent=63 // pred_check_branch
          %604 = sbr.rel (%p602) target = $region68
        $region67: #{tpu_custom_call.1} parent=63 // pred_region
          %v605 = vld [vmem:[%s10] sm:$0x1]
          %v607 = vperm.slane %v605, 0
          %vm609 = vcmask 261120
          %610 = vst.msk [vmem:[%s547] sm:$0xff] %vm609, %v607
        $region68: #{tpu_custom_call.1} parent=63 // pred_fallthru
          _
        %v611 = vld [vmem:[%s558] sm:$0xf]
        %v612 = vld [vmem:[%s563] sm:$0xf]
        %v613 = vld [vmem:[%s563 + $0x4] sm:$0xf]
        %v614 = vld [vmem:[%s563 + $0x8] sm:$0xf]
        %v615 = vld [vmem:[%s563 + $0xc] sm:$0xf]
        %v616 = vld [vmem:[%s567] sm:$0xf]
        %v617 = vld [vmem:[%s572] sm:$0xf]
        %v618 = vld [vmem:[%s572 + $0x4] sm:$0xf]
        %v619 = vld [vmem:[%s572 + $0x8] sm:$0xf]
        %v620 = vld [vmem:[%s572 + $0xc] sm:$0xf]
        %v621 = vld [vmem:[%s575] sm:$0x1]
        %v623 = vperm.slane %v621, 0
        %v629 = vunpack.c.l.b16 %v617
        %v630 = vunpack.c.l.b16 %v618
        %v631 = vunpack.c.l.b16 %v619
        %v632 = vunpack.c.l.b16 %v620
        %v633 = vpack.c.b16 %v630, %v629
        %v634 = vpack.c.b16 %v632, %v631
        %vm637 = vcmask 261120
        %v639 = vsel %vm637, %v611, 0
        %641 = vmatpush.bf16.msra.mxu0 0
        %642 = vmatpush.bf16.msra.mxu0 0
        %643 = vmatpush.bf16.msra.mxu0 0
        %644 = vmatpush.bf16.msra.mxu0 0
        %645 = vmatpush.bf16.msra.mxu0 0
        %646 = vmatpush.bf16.msra.mxu0 0
        %647 = vmatpush.bf16.msra.mxu0 %v634
        %648 = vmatpush.bf16.msra.mxu0 %v633
        %649 = vmatmul.bf16.gmra.mxu0 %v639
        %v650 = vpop.f32.mrf.mxu0
        %v651 = vadd.f32 %v623, %v650
        %v652 = vpop.f32.mrf.mxu0
        %653 = vdwg.mxu0
        %v654 = vld [vmem:[%s580] sm:$0xf]
        %v655 = vld [vmem:[%s580 + $0x4] sm:$0xf]
        %v656 = vld [vmem:[%s585] sm:$0xff]
        %v657 = vld [vmem:[%s585 + $0x8] sm:$0xff]
        %659 = vset.pattern.permute.xlu0 0
        %660 = vperm.xlu0 %659, %v656
        %v661 = vpop.permute.xlu0 %660
        %664 = vset.pattern.permute.xlu0 0
        %665 = vperm.xlu0 %664, %v657
        %v666 = vpop.permute.xlu0 %665
        %v670 = vunpack.c.l.b16 %v654
        %v671 = vunpack.c.l.b16 %v655
        %v672 = vpack.c.b16 %v671, %v670
        %v677 = vunpack.c.l.b16 %v612
        %v678 = vunpack.c.l.b16 %v613
        %v679 = vunpack.c.l.b16 %v614
        %v680 = vunpack.c.l.b16 %v615
        %v681 = vpack.c.b16 %v678, %v677
        %v682 = vpack.c.b16 %v680, %v679
        %v686 = vsel %vm637, %v672, 0
        %688 = vmatpush.bf16.msra.mxu0 0
        %689 = vmatpush.bf16.msra.mxu0 0
        %690 = vmatpush.bf16.msra.mxu0 0
        %691 = vmatpush.bf16.msra.mxu0 0
        %692 = vmatpush.bf16.msra.mxu0 0
        %693 = vmatpush.bf16.msra.mxu0 0
        %694 = vmatpush.bf16.msra.mxu0 %v682
        %695 = vmatpush.bf16.msra.mxu0 %v681
        %696 = vmatmul.bf16.gmra.mxu0 %v686
        %v697 = vpop.f32.mrf.mxu0
        %v698 = vadd.f32 %v661, %v697
        %v699 = vpop.f32.mrf.mxu0
        %v700 = vadd.f32 %v666, %v699
        %701 = vdwg.mxu0
        %v702 = vld [vmem:[%s590] sm:$0xf]
        %v703 = vld [vmem:[%s590 + $0x4] sm:$0xf]
        %v704 = vld [vmem:[%s590 + $0x8] sm:$0xf]
        %v705 = vld [vmem:[%s590 + $0xc] sm:$0xf]
        %v706 = vld [vmem:[%s593] sm:$0x1]
        %v708 = vperm.slane %v706, 0
        %v714 = vunpack.c.l.b16 %v702
        %v715 = vunpack.c.l.b16 %v703
        %v716 = vunpack.c.l.b16 %v704
        %v717 = vunpack.c.l.b16 %v705
        %v718 = vpack.c.b16 %v715, %v714
        %v719 = vpack.c.b16 %v717, %v716
        %v723 = vsel %vm637, %v616, 0
        %725 = vmatpush.bf16.msra.mxu0 0
        %726 = vmatpush.bf16.msra.mxu0 0
        %727 = vmatpush.bf16.msra.mxu0 0
        %728 = vmatpush.bf16.msra.mxu0 0
        %729 = vmatpush.bf16.msra.mxu0 0
        %730 = vmatpush.bf16.msra.mxu0 0
        %731 = vmatpush.bf16.msra.mxu0 %v719
        %732 = vmatpush.bf16.msra.mxu0 %v718
        %733 = vmatmul.bf16.gmra.mxu0 %v723
        %v734 = vpop.f32.mrf.mxu0
        %v735 = vadd.f32 %v708, %v734
        %v736 = vpop.f32.mrf.mxu0
        %737 = vdwg.mxu0
        %v738 = vpack.c.bf16 %v651, %v651
        %v739 = vpack.c.bf16 %v698, %v698
        %v740 = vpack.c.bf16 %v700, %v700
        %v741 = vpack.c.bf16 %v735, %v735
        %v742 = vld [vmem:[%s598] sm:$0xf]
        %v743 = vld [vmem:[%s598 + $0x4] sm:$0xf]
        %vm744 = vcmask 64512
        %v746 = vsel %vm744, %v738, 0
        %vm748 = vcmask 1043456
        %v750 = vsel %vm748, %v739, 0
        %752 = vmatpush.bf16.msra.mxu0 0
        %753 = vmatpush.bf16.msra.mxu0 0
        %754 = vmatpush.bf16.msra.mxu0 0
        %755 = vmatpush.bf16.msra.mxu0 0
        %756 = vmatpush.bf16.msra.mxu0 0
        %757 = vmatpush.bf16.msra.mxu0 0
        %758 = vmatpush.bf16.msra.mxu0 0
        %759 = vmatpush.bf16.msra.mxu0 %v750
        %760 = vmatmul.bf16.gmra.mxu0 %v746
        %v761 = vpop.f32.mrf.mxu0
        %v762 = vadd.f32 0.0, %v761
        %v763 = vpop.f32.mrf.mxu0
        %764 = vdwg.mxu0
        %v765 = vsel %vm744, %v762, -inf
        %766 = vmax.xlane.f32.xlu0 %v765
        %v767 = vpop.xlane.xlu0 %766
        %v768 = vsub.f32 %v762, %v767
        %v769 = vmul.f32 %v768, 1.442695
        %v770 = vpow.pop %v769
        %v771 = vsel %vm744, %v770, 0.0
        %772 = vadd.xlane.f32.xlu0 %v771
        %v773 = vpop.xlane.xlu0 %772
        %v774 = vrcp.pop %v773
        %v775 = vmul.f32 %v770, %v774
        %776 = vst.msk [vmem:[%s554] sm:$0xff] %vm744, %v775
        %v777 = vpack.c.bf16 %v775, %v775
        %v779 = vsel %vm744, %v777, 0
        %v782 = vsel %vm748, %v741, 0
        %784 = vmatpush.bf16.msra.mxu0 0
        %785 = vmatpush.bf16.msra.mxu0 0
        %786 = vmatpush.bf16.msra.mxu0 0
        %787 = vmatpush.bf16.msra.mxu0 0
        %788 = vmatpush.bf16.msra.mxu0 0
        %789 = vmatpush.bf16.msra.mxu0 0
        %790 = vmatpush.bf16.msra.mxu0 0
        %791 = vmatpush.bf16.msra.mxu0 %v782
        %792 = vmatmul.bf16.gmra.mxu0 %v779
        %v793 = vpop.f32.mrf.mxu0
        %v794 = vadd.f32 0.0, %v793
        %v795 = vpop.f32.mrf.mxu0
        %796 = vdwg.mxu0
        %v797 = vpack.c.bf16 %v794, %v794
        %v799 = vunpack.c.l.b16 %v738
        %v800 = vpack.c.b16 %v799, %v799
        %801 = vrot.lane.b32.xlu0 %v800, 120
        %v802 = vpop.permute.xlu0 %801
        %v804 = vsel %vm744, %v802, 0
        %v807 = vsel %vm748, %v740, 0
        %809 = vmatpush.bf16.msra.mxu0 0
        %810 = vmatpush.bf16.msra.mxu0 0
        %811 = vmatpush.bf16.msra.mxu0 0
        %812 = vmatpush.bf16.msra.mxu0 0
        %813 = vmatpush.bf16.msra.mxu0 0
        %814 = vmatpush.bf16.msra.mxu0 0
        %815 = vmatpush.bf16.msra.mxu0 0
        %816 = vmatpush.bf16.msra.mxu0 %v807
        %817 = vmatmul.bf16.gmra.mxu0 %v804
        %v818 = vpop.f32.mrf.mxu0
        %v819 = vadd.f32 0.0, %v818
        %v820 = vpop.f32.mrf.mxu0
        %821 = vdwg.mxu0
        %v822 = vsel %vm744, %v819, -inf
        %823 = vmax.xlane.f32.xlu0 %v822
        %v824 = vpop.xlane.xlu0 %823
        %v825 = vsub.f32 %v819, %v824
        %v826 = vmul.f32 %v825, 1.442695
        %v827 = vpow.pop %v826
        %v828 = vsel %vm744, %v827, 0.0
        %829 = vadd.xlane.f32.xlu0 %v828
        %v830 = vpop.xlane.xlu0 %829
        %v831 = vrcp.pop %v830
        %v832 = vmul.f32 %v827, %v831
        %s833 = scalar_lea.vmem %s554, 8 [#allocation4]
        %834 = vst.msk [vmem:[%s833] sm:$0xff] %vm744, %v832
        %v835 = vpack.c.bf16 %v832, %v832
        %v837 = vunpack.c.l.b16 %v741
        %v838 = vpack.c.b16 %v837, %v837
        %839 = vrot.lane.b32.xlu0 %v838, 120
        %v840 = vpop.permute.xlu0 %839
        %v842 = vsel %vm744, %v835, 0
        %v845 = vsel %vm748, %v840, 0
        %847 = vmatpush.bf16.msra.mxu0 0
        %848 = vmatpush.bf16.msra.mxu0 0
        %849 = vmatpush.bf16.msra.mxu0 0
        %850 = vmatpush.bf16.msra.mxu0 0
        %851 = vmatpush.bf16.msra.mxu0 0
        %852 = vmatpush.bf16.msra.mxu0 0
        %853 = vmatpush.bf16.msra.mxu0 0
        %854 = vmatpush.bf16.msra.mxu0 %v845
        %855 = vmatmul.bf16.gmra.mxu0 %v842
        %v856 = vpop.f32.mrf.mxu0
        %v857 = vadd.f32 0.0, %v856
        %v858 = vpop.f32.mrf.mxu0
        %859 = vdwg.mxu0
        %v860 = vpack.c.bf16 %v857, %v857
        %v862 = vsel %vm744, %v860, 0
        %v865 = vsel %vm748, %v743, 0
        %867 = vmatpush.bf16.msra.mxu0 0
        %868 = vmatpush.bf16.msra.mxu0 0
        %869 = vmatpush.bf16.msra.mxu0 0
        %870 = vmatpush.bf16.msra.mxu0 0
        %871 = vmatpush.bf16.msra.mxu0 0
        %872 = vmatpush.bf16.msra.mxu0 0
        %873 = vmatpush.bf16.msra.mxu0 0
        %874 = vmatpush.bf16.msra.mxu0 %v865
        %875 = vmatmul.bf16.gmra.mxu0 %v862
        %v876 = vpop.f32.mrf.mxu0
        %v877 = vadd.f32 0.0, %v876
        %v878 = vpop.f32.mrf.mxu0
        %879 = vdwg.mxu0
        %v881 = vsel %vm744, %v797, 0
        %v884 = vsel %vm748, %v742, 0
        %886 = vmatpush.bf16.msra.mxu0 0
        %887 = vmatpush.bf16.msra.mxu0 0
        %888 = vmatpush.bf16.msra.mxu0 0
        %889 = vmatpush.bf16.msra.mxu0 0
        %890 = vmatpush.bf16.msra.mxu0 0
        %891 = vmatpush.bf16.msra.mxu0 0
        %892 = vmatpush.bf16.msra.mxu0 0
        %893 = vmatpush.bf16.msra.mxu0 %v884
        %894 = vmatmul.bf16.gmra.mxu0 %v881
        %v895 = vpop.f32.mrf.mxu0
        %v896 = vadd.f32 %v877, %v895
        %v897 = vpop.f32.mrf.mxu0
        %898 = vdwg.mxu0
        %v899 = vld [vmem:[%s547] sm:$0xff]
        %v900 = vadd.f32 %v899, %v896
        %901 = vst.msk [vmem:[%s547] sm:$0xff] %vm637, %v900
        %s902 = sand.u32 %s331, 1
        %s903 = scalar_lea.sflag [#allocation3], %s902
        %s904 = sand.u32 %s331, 1
        %s905 = smul.addr %s904, 8
        %s906 = scalar_lea.vmem [#allocation2], %s905
        %s907 = sand.u32 %s359, 1
        %s908 = scalar_lea.sflag [#allocation5], %s907
        %s909 = sand.u32 %s359, 1
        %s910 = smul.addr %s909, 16
        %s911 = scalar_lea.vmem [#allocation4], %s910
        // Predicated region
        $region69: #{tpu_custom_call.1} parent=63 // pred_check
          %p912 = pneg %p341
        $region70: #{tpu_custom_call.1} parent=63 // pred_check_branch
          %914 = sbr.rel (%p912) target = $region72
        $region71: #{tpu_custom_call.1} parent=63 // pred_region
          %916 = vsyncadd %s903, 0
          %s917 = smul.addr %s34, 8
          %s918 = scalar_lea.hbm %s11, %s917
          %s920 = sshll.u32 %s906, 4
          %s921 = int_to_ptr.vmem [resolvable:$true] %s920
          %s922 = sshll.u32 %s918, 4
          %s923 = int_to_ptr.hbm [resolvable:$true] %s922
          %925 = dma.vmem_to_hbm [thread:$0]  %s921, 128, %s923, %s903
        $region72: #{tpu_custom_call.1} parent=63 // pred_fallthru
          _
        // Predicated region
        $region73: #{tpu_custom_call.1} parent=63 // pred_check
          %p926 = pneg %p369
        $region74: #{tpu_custom_call.1} parent=63 // pred_check_branch
          %928 = sbr.rel (%p926) target = $region76
        $region75: #{tpu_custom_call.1} parent=63 // pred_region
          %s929 = smul.u32 2, %s35
          %931 = vsyncadd %s908, 0
          %s932 = smul.addr %s34, 4
          %s933 = sadd.s32 %s929, %s932
          %s934 = smul.addr %s933, 8
          %s935 = scalar_lea.hbm %s12, %s934
          %s936 = sshll.u32 %s911, 4
          %s937 = int_to_ptr.vmem [resolvable:$true] %s936
          %s938 = sshll.u32 %s935, 4
          %s939 = int_to_ptr.hbm [resolvable:$true] %s938
          %944 = dma.vmem_to_hbm [thread:$0]  %s937, 256, %s939, %s908, 128, 128, 8
        $region76: #{tpu_custom_call.1} parent=63 // pred_fallthru
          _
      $region64: #{tpu_custom_call.1} parent=5 // pred_fallthru
        _
      %p945 = scmp.le.s32.totalorder 2, %s25
      // Predicated region
      $region77: #{tpu_custom_call.1} parent=5 // pred_check
        %p946 = pneg %p945
      $region78: #{tpu_custom_call.1} parent=5 // pred_check_branch
        %948 = sbr.rel (%p946) target = $region80
      $region79: #{tpu_custom_call.1} parent=5 // pred_region
        %s949 = ssub.s32 %s25, 2
        // Predicated region
        $region81: #{tpu_custom_call.1} parent=79 // pred_check
          %p950 = pneg %p347
        $region82: #{tpu_custom_call.1} parent=79 // pred_check_branch
          %952 = sbr.rel (%p950) target = $region84
        $region83: #{tpu_custom_call.1} parent=79 // pred_region
          %s953 = sand.u32 %s332, 1
          %s954 = scalar_lea.sflag [#allocation3], %s953
          %s955 = sand.u32 %s332, 1
          %s956 = smul.addr %s955, 8
          %s957 = scalar_lea.vmem [#allocation2], %s956
          %959 = dma.done %s954, 128
        $region84: #{tpu_custom_call.1} parent=79 // pred_fallthru
          _
        // Predicated region
        $region85: #{tpu_custom_call.1} parent=79 // pred_check
          %p960 = pneg %p375
        $region86: #{tpu_custom_call.1} parent=79 // pred_check_branch
          %962 = sbr.rel (%p960) target = $region88
        $region87: #{tpu_custom_call.1} parent=79 // pred_region
          %s963 = sand.u32 %s360, 1
          %s964 = scalar_lea.sflag [#allocation5], %s963
          %s965 = sand.u32 %s360, 1
          %s966 = smul.addr %s965, 16
          %s967 = scalar_lea.vmem [#allocation4], %s966
          %969 = dma.done %s964, 256
        $region88: #{tpu_custom_call.1} parent=79 // pred_fallthru
          _
      $region80: #{tpu_custom_call.1} parent=5 // pred_fallthru
        _
    $region6: #{tpu_custom_call.1} parent=1 // loop_footer
      %s29 = sadd.s32 1, %s25
    $region7: #{tpu_custom_call.1} parent=1 // loop_footer_branch
      %24 = sbr.rel target = $region3
    $region8: #{tpu_custom_call.1} parent=1 // loop_exit
      _
    %970 = vsyncpa [#allocation3], 1
    %s971 = scalar_lea.sflag [#allocation3], 1
    %972 = vsyncpa %s971, 1
    %973 = vsyncpa [#allocation5], 1
    %s974 = scalar_lea.sflag [#allocation5], 1
    %975 = vsyncpa %s974, 1

</llo_original>
